<compile_context>
chip_gen: v7x
topology: tpu7x:2x2x1
jax: 0.10.0
libtpu: 0.0.40
codegen_flags: <defaults>
</compile_context>

<pallas_src>
import functools

import jax
import jax.numpy as jnp
from jax.experimental import pallas as pl
from jax.experimental.pallas import tpu as pltpu


# --------------------------------------------------------------------------
# Pallas kernels
# --------------------------------------------------------------------------
def _pool_full_kernel(x_ref, o_ref, *, hw_total):
    """AdaptiveAvgPool2d(1) when the whole HW axis fits one lane block."""
    x = x_ref[...].astype(jnp.float32)            # upcast in vregs
    o_ref[...] = jnp.sum(x, axis=-1, keepdims=True) * (1.0 / hw_total)


def _pool_tiled_kernel(x_ref, o_ref, acc_ref, *, hw_total, thw, need_mask):
    """AdaptiveAvgPool2d(1) with the HW axis tiled along a reduction grid axis.

    x_ref: (br, C, thw) native dtype; o_ref: (br, C, 1) f32;
    acc_ref: (br, C, 128) f32 VMEM scratch (lane-group partial sums).
    Grid = (row_tiles, hw_tiles); hw is the last ("arbitrary") axis.
    Per-tile accumulation is pure VPU adds; the single cross-lane (XLU)
    reduction happens only in the finalize step.
    """
    j = pl.program_id(1)
    last = pl.num_programs(1) - 1

    @pl.when(j == 0)
    def _():
        acc_ref[...] = jnp.zeros_like(acc_ref)

    x = x_ref[...].astype(jnp.float32)

    def accumulate(xv):
        acc = acc_ref[...]
        for g in range(thw // 128):               # static unroll, lane-aligned slices
            acc = acc + xv[:, :, g * 128:(g + 1) * 128]
        acc_ref[...] = acc

    if need_mask:
        # Only the last HW tile can read past hw_total -> mask only there.
        @pl.when(j < last)
        def _():
            accumulate(x)

        @pl.when(j == last)
        def _():
            lane = jax.lax.broadcasted_iota(jnp.int32, x.shape, 2) + j * thw
            accumulate(jnp.where(lane < hw_total, x, 0.0))
    else:
        accumulate(x)

    @pl.when(j == last)
    def _():
        o_ref[...] = (jnp.sum(acc_ref[...], axis=-1, keepdims=True)
                      * (1.0 / hw_total))


def _modulate_kernel(x_ref, g_ref, o_ref):
    """output = x * gate, gate (br, C, 1) broadcast over the spatial axis."""
    x = x_ref[...].astype(jnp.float32)            # explicit upcast (v5e has no bf16 VPU)
    o_ref[...] = (x * g_ref[...]).astype(o_ref.dtype)


# --------------------------------------------------------------------------
# Tiling / budgets
# --------------------------------------------------------------------------
def _round_up(a, m):
    return ((a + m - 1) // m) * m


def _tpu_budgets():
    """(target bytes for one x block, vmem_limit_bytes), by TPU generation."""
    cap = None
    try:
        cap = getattr(pltpu.get_tpu_info(), "vmem_capacity_bytes", None)
    except Exception:
        cap = None
    if cap is None:
        cap = 64 * 1024 * 1024                    # conservative (v7x-sized)
    if cap >= 100 * 1024 * 1024:                  # v5e / v6e: 128 MiB physical VMEM
        return 8 * 1024 * 1024, 96 * 1024 * 1024
    return 6 * 1024 * 1024, 44 * 1024 * 1024      # v7x: 64 MiB physical VMEM


def _pick_tiles(nt, c, hw, dtype, target_bytes):
    """Pick (row block, HW lane tile) so one x block is ~target_bytes of VMEM.

    Working set of the modulate kernel is ~4x an x block (double-buffered in +
    out), which stays well under the vmem limit for all generations.
    """
    itemsize = jnp.dtype(dtype).itemsize
    sublane = {4: 8, 2: 16, 1: 32}.get(itemsize, 8)
    c_pad = _round_up(c, sublane)

    def slab_bytes(lanes):                        # one row of an x block, VMEM-padded
        return c_pad * _round_up(lanes, 128) * itemsize

    if slab_bytes(hw) <= target_bytes:
        # Full HW in one lane block: fully contiguous HBM DMA, no reduction axis.
        thw = hw
    else:
        # Balanced 128-aligned lane tiles under the budget.
        groups_cap = max(1, target_bytes // slab_bytes(128))
        total_groups = _round_up(hw, 128) // 128
        n_hw = -(-total_groups // groups_cap)     # ceil
        thw = _round_up(-(-hw // n_hw), 128)

    br = max(1, target_bytes // max(1, slab_bytes(thw)))
    br = min(br, nt)
    if br >= nt and nt > 1:
        br = (nt + 1) // 2                        # keep >=2 row steps (v7x 2-TC sharding)
    return br, thw


def _fold_bn(gamma, beta, mean, var, eps=1e-5):
    s = gamma / jnp.sqrt(var + eps)
    o = beta - mean * s
    return s, o


# --------------------------------------------------------------------------
# Forward
# --------------------------------------------------------------------------
def me_module_forward(x, params, n_segment=8, target_bytes=None):
    nt, c, h, w = x.shape
    assert nt % n_segment == 0
    n = nt // n_segment
    hw = h * w
    x3 = x.reshape(nt, c, hw)                     # native dtype, no f32 HBM copy

    auto_target, vmem_cap = _tpu_budgets()
    if target_bytes is None:
        target_bytes = auto_target

    br, thw = _pick_tiles(nt, c, hw, x3.dtype, target_bytes)
    n_hw = pl.cdiv(hw, thw)
    if n_hw == 1:
        thw = hw                                  # degenerate tiling -> full HW path
    n_row = pl.cdiv(nt, br)
    need_mask = (hw % thw) != 0

    # ---- kernel 1: spatial average pooling (HBM-bandwidth bound) -----------
    if n_hw == 1:
        pooled = pl.pallas_call(
            functools.partial(_pool_full_kernel, hw_total=hw),
            out_shape=jax.ShapeDtypeStruct((nt, c, 1), jnp.float32),
            grid=(n_row,),
            in_specs=[pl.BlockSpec((br, c, hw), lambda i: (i, 0, 0))],
            out_specs=pl.BlockSpec((br, c, 1), lambda i: (i, 0, 0)),
            compiler_params=pltpu.CompilerParams(
                dimension_semantics=("parallel",),
                vmem_limit_bytes=vmem_cap),
        )(x3)
    else:
        pooled = pl.pallas_call(
            functools.partial(_pool_tiled_kernel, hw_total=hw, thw=thw,
                              need_mask=need_mask),
            out_shape=jax.ShapeDtypeStruct((nt, c, 1), jnp.float32),
            grid=(n_row, n_hw),
            in_specs=[pl.BlockSpec((br, c, thw), lambda i, j: (i, 0, j))],
            out_specs=pl.BlockSpec((br, c, 1), lambda i, j: (i, 0, 0)),
            scratch_shapes=[pltpu.VMEM((br, c, 128), jnp.float32)],
            compiler_params=pltpu.CompilerParams(
                dimension_semantics=("parallel", "arbitrary"),
                vmem_limit_bytes=vmem_cap),
        )(x3)

    # ---- tiny excitation path: 1x1 convs + BN (eval) + sigmoid, plain jnp ---
    # (m, C)x(C, C/r) with m in the tens — far below one MXU tile, so a
    # pallas_call here is pure launch overhead.  BN scale folded into weights.
    pr = pooled.reshape(n, n_segment, c)
    p1 = pr[:, :-1, :].reshape(-1, c)             # frames t   = 0..T-2
    p2 = pr[:, 1:, :].reshape(-1, c)              # frames t+1 = 1..T-1

    s1, o1 = _fold_bn(*params["bn1"])
    s2, o2 = _fold_bn(*params["bn2"])
    s3, o3 = _fold_bn(*params["bn3"])
    hi = jax.lax.Precision.HIGHEST
    w1s = params["w1"].T * s1[None, :]            # (C, C/r)
    w2s = params["w2"].T * s2[None, :]            # (C, C/r)
    w3s = params["w3"].T * s3[None, :]            # (C/r, C)
    b1 = jnp.dot(p1, w1s, precision=hi) + o1[None, :]
    b2 = jnp.dot(p2, w2s, precision=hi) + o2[None, :]
    d = jnp.dot(b2 - b1, w3s, precision=hi) + o3[None, :]
    # output = x + x*(sigmoid(d)-0.5) = x * (sigmoid(d)+0.5); the F.pad'ed
    # zero frame per segment (d == 0) corresponds to gate == 1.0.
    gate = jax.nn.sigmoid(d) + 0.5
    gate = gate.reshape(n, n_segment - 1, c)
    gate = jnp.pad(gate, ((0, 0), (0, 1), (0, 0)), constant_values=1.0)
    gate = gate.reshape(nt, c, 1).astype(jnp.float32)

    # ---- kernel 2: output = x * gate, written back in x's dtype -------------
    out3 = pl.pallas_call(
        _modulate_kernel,
        out_shape=jax.ShapeDtypeStruct((nt, c, hw), x3.dtype),
        grid=(n_row, n_hw),
        in_specs=[pl.BlockSpec((br, c, thw), lambda i, j: (i, 0, j)),
                  pl.BlockSpec((br, c, 1), lambda i, j: (i, 0, 0))],
        out_specs=pl.BlockSpec((br, c, thw), lambda i, j: (i, 0, j)),
        compiler_params=pltpu.CompilerParams(
            dimension_semantics=("parallel", "parallel"),
            vmem_limit_bytes=vmem_cap),
    )(x3, gate)

    return out3.reshape(nt, c, h, w)


# --------------------------------------------------------------------------
# Deterministic parameter init (matches the shapes in MEModule.__init__)
# --------------------------------------------------------------------------
def init_params(key, channel, reduction):
    cr = channel // reduction
    ks = jax.random.split(key, 15)

    def bn(kg, kb, km, kv, nf):
        gamma = 1.0 + 0.1 * jax.random.normal(kg, (nf,), jnp.float32)
        beta = 0.1 * jax.random.normal(kb, (nf,), jnp.float32)
        mean = 0.1 * jax.random.normal(km, (nf,), jnp.float32)
        var = jnp.abs(jax.random.normal(kv, (nf,), jnp.float32)) + 0.5
        return (gamma, beta, mean, var)

    return {
        # Conv2d weights are (out_ch, in_ch) for the 1x1 kernels.
        "w1": 0.1 * jax.random.normal(ks[0], (cr, channel), jnp.float32),
        "w2": 0.1 * jax.random.normal(ks[1], (cr, channel), jnp.float32),
        "w3": 0.1 * jax.random.normal(ks[2], (channel, cr), jnp.float32),
        "bn1": bn(ks[3], ks[4], ks[5], ks[6], cr),
        "bn2": bn(ks[7], ks[8], ks[9], ks[10], cr),
        "bn3": bn(ks[11], ks[12], ks[13], ks[14], channel),
    }


# --------------------------------------------------------------------------
# Pure-JAX reference (mirrors the PyTorch forward, eval-mode BN)
# --------------------------------------------------------------------------
def reference(x, params, n_segment):
    nt, c, h, w = x.shape
    n = nt // n_segment
    xr = x.reshape(n, n_segment, c, h, w)
    t_fea = xr[:, :-1].reshape(-1, c, h, w)
    tp1_fea = xr[:, 1:].reshape(-1, c, h, w)
    p1 = t_fea.mean(axis=(2, 3))
    p2 = tp1_fea.mean(axis=(2, 3))

    def bn(z, p):
        g, b, mu, v = p
        return (z - mu) / jnp.sqrt(v + 1e-5) * g + b

    hi = jax.lax.Precision.HIGHEST
    b1 = bn(jnp.dot(p1, params["w1"].T, precision=hi), params["bn1"])
    b2 = bn(jnp.dot(p2, params["w2"].T, precision=hi), params["bn2"])
    d = bn(jnp.dot(b2 - b1, params["w3"].T, precision=hi), params["bn3"])
    d = d.reshape(n, n_segment - 1, c)
    d = jnp.pad(d, ((0, 0), (0, 1), (0, 0)))
    d = d.reshape(nt, c)
    y = jax.nn.sigmoid(d) - 0.5
    return x + x * y[:, :, None, None]


# --------------------------------------------------------------------------
if __name__ == "__main__":
    channel, reduction, n_segment = 16, 8, 8
    n_batch, h, w = 2, 8, 8
    nt = n_batch * n_segment

    key = jax.random.PRNGKey(0)
    kx, kp = jax.random.split(key)
    params = init_params(kp, channel, reduction)

    # 1) Default path: full HW in one lane block, no reduction grid axis.
    x = jax.random.normal(kx, (nt, channel, h, w), jnp.float32)
    out = jax.block_until_ready(me_module_forward(x, params, n_segment=n_segment))
    ref = reference(x, params, n_segment)
    assert out.shape == x.shape and out.dtype == x.dtype
    assert jnp.allclose(out, ref, atol=1e-4, rtol=1e-4), (
        float(jnp.max(jnp.abs(out - ref))))

    # 2) Force the HW-tiled / ragged-tail pool path with a tiny block budget
    #    (hw = 14*14 = 196 is not a multiple of the 128-lane tile).
    x2 = jax.random.normal(kx, (nt, channel, 14, 14), jnp.float32)
    out2 = jax.block_until_ready(
        me_module_forward(x2, params, n_segment=n_segment, target_bytes=8 * 1024))
    ref2 = reference(x2, params, n_segment)
    assert jnp.allclose(out2, ref2, atol=1e-4, rtol=1e-4), (
        float(jnp.max(jnp.abs(out2 - ref2))))

    print("KERNEL_OK")
</pallas_src>

<mosaic_0001>
module attributes {stable_mosaic.version = 11 : i64} {
  func.func @_pool_full_kernel(%arg0: i32, %arg1: memref<8x16x64xf32, #tpu.memory_space<vmem>>, %arg2: memref<8x16x1xf32, #tpu.memory_space<vmem>>) attributes {dimension_semantics = [#tpu.dimension_semantics<parallel>], iteration_bounds = array<i64: 2>, scalar_prefetch = 0 : i64, scratch_operands = 0 : i64, tpu.core_type = #tpu.core_type<tc>, window_params = [{transform_indices = @transform_0, window_bounds = array<i64: 8, 16, 64>}, {transform_indices = @transform_1, window_bounds = array<i64: 8, 16, 1>}]} {
    %c0 = arith.constant 0 : index
    %c0_0 = arith.constant 0 : index
    %c0_1 = arith.constant 0 : index
    %0 = vector.load %arg1[%c0, %c0_0, %c0_1] : memref<8x16x64xf32, #tpu.memory_space<vmem>>, vector<8x16x64xf32>
    %cst = arith.constant dense<0.000000e+00> : vector<8x16xf32>
    %1 = vector.multi_reduction <add>, %0, %cst [2] : vector<8x16x64xf32> to vector<8x16xf32>
    %2 = vector.shape_cast %1 : vector<8x16xf32> to vector<8x16x1xf32>
    %cst_2 = arith.constant 1.562500e-02 : f32
    %3 = vector.broadcast %cst_2 : f32 to vector<8x16x1xf32>
    %4 = arith.mulf %2, %3 : vector<8x16x1xf32>
    %c0_3 = arith.constant 0 : index
    %c0_4 = arith.constant 0 : index
    %c0_5 = arith.constant 0 : index
    %5 = vector.load %arg2[%c0_3, %c0_4, %c0_5] : memref<8x16x1xf32, #tpu.memory_space<vmem>>, vector<8x16x1xf32>
    tpu.vector_store %arg2[%c0_3, %c0_4, %c0_5], %4 {strides = array<i32>} : memref<8x16x1xf32, #tpu.memory_space<vmem>>, vector<8x16x1xf32>,
    return
  }
  func.func @transform_0(%arg0: i32) -> (i32, i32, i32) {
    %c0_i32 = arith.constant 0 : i32
    %c0_i32_0 = arith.constant 0 : i32
    %c0_i32_1 = arith.constant 0 : i32
    return %arg0, %c0_i32, %c0_i32_0 : i32, i32, i32
  }
  func.func @transform_1(%arg0: i32) -> (i32, i32, i32) {
    %c0_i32 = arith.constant 0 : i32
    %c0_i32_0 = arith.constant 0 : i32
    %c0_i32_1 = arith.constant 0 : i32
    return %arg0, %c0_i32, %c0_i32_0 : i32, i32, i32
  }
}

</mosaic_0001>

<llo_original>
// kernel: tpu_custom_call.1
$region0: #{tpu_custom_call.1}
  #allocation0 [shape = 'u32[]', space=smem, size = 0x4, offset = 0x4, fixed_abs, tag = 'smem constant byte address 0x4 - core index']
  #allocation1 [shape = 'u32[144,128]{1,0:T(1,128)}', space=vmem, size = 0x12000, scoped, tag = 'internal scratch']
  %s0 = inlined_call_operand.hbm [shape: f32[16,16,64], index: 0, kind: input, shape index: {}]
  %s1 = inlined_call_operand.vmem [shape: f32[16,16,1], index: 1, kind: output, shape index: {}]
  %s2 = sld [smem:[#allocation0]]
  $region41: #{tpu_custom_call.1} parent=0
    _
  %s4 = ssub.s32 1, %s2
  %s5 = scalar_select 0, %s4, %s2
  $region1: #{tpu_custom_call.1} parent=0
    #allocation2 [shape = 'u8[131072]{0}', space=vmem, size = 0x20000, scoped, tag = 'input window, operand 0']
    #allocation3 [shape = 's32[2]{0}', space=sflag, size = 0x8, scoped, tag = 'scoped memory for tpu_custom_call.1']
    %6 = vsyncpa [#allocation3], 0
    %s7 = scalar_lea.sflag [#allocation3], 1
    %8 = vsyncpa %s7, 0
    loop: start=0, step=1, limit=4
    $region2: #{tpu_custom_call.1} parent=1 // loop_pre_header
      _
    $region3: #{tpu_custom_call.1} parent=1 // loop_header
      %s10 = sphi 0, %s14
      %p11 = scmp.ge.s32.totalorder %s10, 4
      %s20 = sphi 0, %s22
      %s23 = sphi 0, %s20
      %s24 = sphi 0, %s23
      %s40 = sphi 0, %s24
      %s46 = sphi 0, %s48
      %s49 = sphi 0, %s46
      %s50 = sphi 0, %s49
      %s66 = sphi 0, %s50
    $region4: #{tpu_custom_call.1} parent=1 // loop_header_branch
      %13 = sbr.rel (%p11) target = $region8
    $region5: #{tpu_custom_call.1} parent=1 // loop_body
      %s15 = ssub.s32 %s10, 1
      %s16 = ssub.s32 %s10, 2
      %s17 = sadd.s32 %s10, 1
      %s18 = ssub.s32 %s10, %s17
      %p19 = scmp.eq.s32.totalorder %s18, 0
      %s21 = sadd.s32 %s20, 1
      %s22 = scalar_select %p19, %s20, %s21
      %p25 = pneg %p19
      %p26 = scmp.eq.s32.totalorder %s10, 1
      %p27 = por %p25, %p26
      %p28 = scmp.ne.s32.totalorder %s20, %s23
      %p29 = scmp.eq.s32.totalorder %s10, 0
      %p30 = por %p28, %p29
      %p31 = scmp.ne.s32.totalorder %s20, %s23
      %p32 = scmp.eq.s32.totalorder %s15, 1
      %p33 = por %p31, %p32
      %p34 = scmp.ne.s32.totalorder %s23, %s24
      %p35 = scmp.eq.s32.totalorder %s15, 0
      %p36 = por %p34, %p35
      %p37 = scmp.ne.s32.totalorder %s23, %s24
      %p38 = scmp.eq.s32.totalorder %s16, 1
      %p39 = por %p37, %p38
      %p41 = scmp.ne.s32.totalorder %s24, %s40
      %p42 = scmp.eq.s32.totalorder %s16, 0
      %p43 = por %p41, %p42
      %s44 = ssub.s32 %s10, %s17
      %p45 = scmp.eq.s32.totalorder %s44, 0
      %s47 = sadd.s32 %s46, 1
      %s48 = scalar_select %p45, %s46, %s47
      %p51 = pneg %p45
      %p52 = scmp.eq.s32.totalorder %s10, 1
      %p53 = por %p51, %p52
      %p54 = scmp.ne.s32.totalorder %s46, %s49
      %p55 = scmp.eq.s32.totalorder %s10, 0
      %p56 = por %p54, %p55
      %p57 = scmp.ne.s32.totalorder %s46, %s49
      %p58 = scmp.eq.s32.totalorder %s15, 1
      %p59 = por %p57, %p58
      %p60 = scmp.ne.s32.totalorder %s49, %s50
      %p61 = scmp.eq.s32.totalorder %s15, 0
      %p62 = por %p60, %p61
      %p63 = scmp.ne.s32.totalorder %s49, %s50
      %p64 = scmp.eq.s32.totalorder %s16, 1
      %p65 = por %p63, %p64
      %p67 = scmp.ne.s32.totalorder %s50, %s66
      %p68 = scmp.eq.s32.totalorder %s16, 0
      %p69 = por %p67, %p68
      %p70 = scmp.le.s32.totalorder 1, %s10
      %p71 = scmp.lt.s32.totalorder %s10, 3
      %p72 = pnand %p70, %p71
      %p73 = pneg %p72
      // Predicated region
      $region9: #{tpu_custom_call.1} parent=5 // pred_check
        _
      $region10: #{tpu_custom_call.1} parent=5 // pred_check_branch
        %75 = sbr.rel (%p72) target = $region12
      $region11: #{tpu_custom_call.1} parent=5 // pred_region
        %s76 = ssub.s32 %s10, 1
      $region12: #{tpu_custom_call.1} parent=5 // pred_fallthru
        _
      %p77 = scmp.lt.s32.totalorder %s10, 2
      // Predicated region
      $region13: #{tpu_custom_call.1} parent=5 // pred_check
        %p78 = pneg %p77
      $region14: #{tpu_custom_call.1} parent=5 // pred_check_branch
        %80 = sbr.rel (%p78) target = $region16
      $region15: #{tpu_custom_call.1} parent=5 // pred_region
        // Predicated region
        $region17: #{tpu_custom_call.1} parent=15 // pred_check
          %p81 = pneg %p30
        $region18: #{tpu_custom_call.1} parent=15 // pred_check_branch
          %83 = sbr.rel (%p81) target = $region20
        $region19: #{tpu_custom_call.1} parent=15 // pred_region
          %s84 = sand.u32 %s20, 1
          %s85 = scalar_lea.sflag [#allocation3], %s84
          %s86 = sand.u32 %s20, 1
          %s87 = smul.addr %s86, 128
          %s88 = scalar_lea.vmem [#allocation2], %s87
          %s89 = smul.u32 8, %s10
          %s91 = ssub.s32 2048, 2048
          %92 = vsyncadd %s85, %s91
          %s93 = smul.addr %s89, 2
          %s94 = smul.addr %s93, 128
          %s95 = scalar_lea.hbm %s0, %s94
          %s96 = sshll.u32 %s88, 4
          %s97 = int_to_ptr.vmem [resolvable:$true] %s96
          %102 = dma.hbm_to_vmem [thread:$0]  %s95, 2048, %s97, %s85, 128, 128, 8
        $region20: #{tpu_custom_call.1} parent=15 // pred_fallthru
          _
      $region16: #{tpu_custom_call.1} parent=5 // pred_fallthru
        _
      %p103 = scmp.le.s32.totalorder 1, %s10
      %p104 = scmp.lt.s32.totalorder %s10, 3
      %p105 = pnand %p103, %p104
      %p106 = pneg %p105
      // Predicated region
      $region21: #{tpu_custom_call.1} parent=5 // pred_check
        _
      $region22: #{tpu_custom_call.1} parent=5 // pred_check_branch
        %108 = sbr.rel (%p105) target = $region24
      $region23: #{tpu_custom_call.1} parent=5 // pred_region
        %s109 = ssub.s32 %s10, 1
        %s110 = sand.u32 %s23, 1
        %s111 = scalar_lea.sflag [#allocation3], %s110
        %s112 = sand.u32 %s23, 1
        %s113 = smul.addr %s112, 128
        %s114 = scalar_lea.vmem [#allocation2], %s113
        // Predicated region
        $region25: #{tpu_custom_call.1} parent=23 // pred_check
          %p115 = pneg %p36
        $region26: #{tpu_custom_call.1} parent=23 // pred_check_branch
          %117 = sbr.rel (%p115) target = $region28
        $region27: #{tpu_custom_call.1} parent=23 // pred_region
          %118 = dma.done %s111, 2048
        $region28: #{tpu_custom_call.1} parent=23 // pred_fallthru
          _
        %s119 = sand.u32 %s23, 1
        %s120 = scalar_lea.sflag [#allocation3], %s119
        %s121 = sand.u32 %s23, 1
        %s122 = smul.addr %s121, 128
        %s123 = scalar_lea.vmem [#allocation2], %s122
        %p124 = pneg %p36
        %p125 = pneg %p33
        %p126 = pneg %p62
        %p127 = pneg %p59
        %s128 = smul.u32 8, %s15
        %p129 = scmp.lt.s32.totalorder %s128, 15
        %s130 = scalar_select %p129, %s128, 15
        %s131 = smul.addr %s130, 2
        %s132 = smul.addr %s131, 8
        %s133 = scalar_lea.vmem %s1, %s132
        %s134 = smul.u32 8, %s15
        %s135 = smul.u32 8, %s15
        %p136 = scmp.lt.s32.totalorder %s135, 15
        %s137 = scalar_select %p136, %s135, 15
        %s138 = smul.addr %s137, 2
        %s139 = smul.addr %s138, 8
        %s140 = scalar_lea.vmem %s1, %s139
        %s141 = smul.u32 8, %s15
        %v142 = vld [vmem:[%s114] sm:$0xff]
        %v143 = vld [vmem:[%s114 + $0x8] sm:$0xff]
        %v144 = vld [vmem:[%s114 + $0x10] sm:$0xff]
        %v145 = vld [vmem:[%s114 + $0x18] sm:$0xff]
        %v146 = vld [vmem:[%s114 + $0x20] sm:$0xff]
        %v147 = vld [vmem:[%s114 + $0x28] sm:$0xff]
        %v148 = vld [vmem:[%s114 + $0x30] sm:$0xff]
        %v149 = vld [vmem:[%s114 + $0x38] sm:$0xff]
        %v150 = vld [vmem:[%s114 + $0x40] sm:$0xff]
        %v151 = vld [vmem:[%s114 + $0x48] sm:$0xff]
        %v152 = vld [vmem:[%s114 + $0x50] sm:$0xff]
        %v153 = vld [vmem:[%s114 + $0x58] sm:$0xff]
        %v154 = vld [vmem:[%s114 + $0x60] sm:$0xff]
        %v155 = vld [vmem:[%s114 + $0x68] sm:$0xff]
        %v156 = vld [vmem:[%s114 + $0x70] sm:$0xff]
        %v157 = vld [vmem:[%s114 + $0x78] sm:$0xff]
        %vm158 = vcmask 523264
        %v159 = vsel %vm158, %v142, 0.0
        %160 = vadd.xlane.f32.xlu0 %v159
        %v161 = vpop.xlane.xlu0 %160
        %v162 = vsel %vm158, %v143, 0.0
        %163 = vadd.xlane.f32.xlu0 %v162
        %v164 = vpop.xlane.xlu0 %163
        %v165 = vsel %vm158, %v144, 0.0
        %166 = vadd.xlane.f32.xlu0 %v165
        %v167 = vpop.xlane.xlu0 %166
        %v168 = vsel %vm158, %v145, 0.0
        %169 = vadd.xlane.f32.xlu0 %v168
        %v170 = vpop.xlane.xlu0 %169
        %v171 = vsel %vm158, %v146, 0.0
        %172 = vadd.xlane.f32.xlu0 %v171
        %v173 = vpop.xlane.xlu0 %172
        %v174 = vsel %vm158, %v147, 0.0
        %175 = vadd.xlane.f32.xlu0 %v174
        %v176 = vpop.xlane.xlu0 %175
        %v177 = vsel %vm158, %v148, 0.0
        %178 = vadd.xlane.f32.xlu0 %v177
        %v179 = vpop.xlane.xlu0 %178
        %v180 = vsel %vm158, %v149, 0.0
        %181 = vadd.xlane.f32.xlu0 %v180
        %v182 = vpop.xlane.xlu0 %181
        %v183 = vsel %vm158, %v150, 0.0
        %184 = vadd.xlane.f32.xlu0 %v183
        %v185 = vpop.xlane.xlu0 %184
        %v186 = vsel %vm158, %v151, 0.0
        %187 = vadd.xlane.f32.xlu0 %v186
        %v188 = vpop.xlane.xlu0 %187
        %v189 = vsel %vm158, %v152, 0.0
        %190 = vadd.xlane.f32.xlu0 %v189
        %v191 = vpop.xlane.xlu0 %190
        %v192 = vsel %vm158, %v153, 0.0
        %193 = vadd.xlane.f32.xlu0 %v192
        %v194 = vpop.xlane.xlu0 %193
        %v195 = vsel %vm158, %v154, 0.0
        %196 = vadd.xlane.f32.xlu0 %v195
        %v197 = vpop.xlane.xlu0 %196
        %v198 = vsel %vm158, %v155, 0.0
        %199 = vadd.xlane.f32.xlu0 %v198
        %v200 = vpop.xlane.xlu0 %199
        %v201 = vsel %vm158, %v156, 0.0
        %202 = vadd.xlane.f32.xlu0 %v201
        %v203 = vpop.xlane.xlu0 %202
        %v204 = vsel %vm158, %v157, 0.0
        %205 = vadd.xlane.f32.xlu0 %v204
        %v206 = vpop.xlane.xlu0 %205
        %v207 = vmul.f32 %v161, 0.015625
        %v208 = vmul.f32 %v164, 0.015625
        %v209 = vmul.f32 %v167, 0.015625
        %v210 = vmul.f32 %v170, 0.015625
        %v211 = vmul.f32 %v173, 0.015625
        %v212 = vmul.f32 %v176, 0.015625
        %v213 = vmul.f32 %v179, 0.015625
        %v214 = vmul.f32 %v182, 0.015625
        %v215 = vmul.f32 %v185, 0.015625
        %v216 = vmul.f32 %v188, 0.015625
        %v217 = vmul.f32 %v191, 0.015625
        %v218 = vmul.f32 %v194, 0.015625
        %v219 = vmul.f32 %v197, 0.015625
        %v220 = vmul.f32 %v200, 0.015625
        %v221 = vmul.f32 %v203, 0.015625
        %v222 = vmul.f32 %v206, 0.015625
        %vm223 = vcmask 7168
        %224 = vst.msk [vmem:[%s140] sm:$0xff] %vm223, %v207
        %225 = vst.msk [vmem:[%s140 + $0x8] sm:$0xff] %vm223, %v208
        %226 = vst.msk [vmem:[%s140 + $0x10] sm:$0xff] %vm223, %v209
        %227 = vst.msk [vmem:[%s140 + $0x18] sm:$0xff] %vm223, %v210
        %228 = vst.msk [vmem:[%s140 + $0x20] sm:$0xff] %vm223, %v211
        %229 = vst.msk [vmem:[%s140 + $0x28] sm:$0xff] %vm223, %v212
        %230 = vst.msk [vmem:[%s140 + $0x30] sm:$0xff] %vm223, %v213
        %231 = vst.msk [vmem:[%s140 + $0x38] sm:$0xff] %vm223, %v214
        %232 = vst.msk [vmem:[%s140 + $0x40] sm:$0xff] %vm223, %v215
        %233 = vst.msk [vmem:[%s140 + $0x48] sm:$0xff] %vm223, %v216
        %234 = vst.msk [vmem:[%s140 + $0x50] sm:$0xff] %vm223, %v217
        %235 = vst.msk [vmem:[%s140 + $0x58] sm:$0xff] %vm223, %v218
        %236 = vst.msk [vmem:[%s140 + $0x60] sm:$0xff] %vm223, %v219
        %237 = vst.msk [vmem:[%s140 + $0x68] sm:$0xff] %vm223, %v220
        %238 = vst.msk [vmem:[%s140 + $0x70] sm:$0xff] %vm223, %v221
        %239 = vst.msk [vmem:[%s140 + $0x78] sm:$0xff] %vm223, %v222
        %s240 = smul.u32 8, %s15
        %p241 = scmp.lt.s32.totalorder %s240, 15
        %s242 = scalar_select %p241, %s240, 15
        %s243 = smul.addr %s242, 2
        %s244 = smul.addr %s243, 8
        %s245 = scalar_lea.vmem %s1, %s244
        // Predicated region
        $region29: #{tpu_custom_call.1} parent=23 // pred_check
          %p246 = pneg %p59
        $region30: #{tpu_custom_call.1} parent=23 // pred_check_branch
          %248 = sbr.rel (%p246) target = $region32
        $region31: #{tpu_custom_call.1} parent=23 // pred_region
          %s249 = smul.u32 8, %s15
        $region32: #{tpu_custom_call.1} parent=23 // pred_fallthru
          _
      $region24: #{tpu_custom_call.1} parent=5 // pred_fallthru
        _
      %p250 = scmp.le.s32.totalorder 2, %s10
      // Predicated region
      $region33: #{tpu_custom_call.1} parent=5 // pred_check
        %p251 = pneg %p250
      $region34: #{tpu_custom_call.1} parent=5 // pred_check_branch
        %253 = sbr.rel (%p251) target = $region36
      $region35: #{tpu_custom_call.1} parent=5 // pred_region
        %s254 = ssub.s32 %s10, 2
        // Predicated region
        $region37: #{tpu_custom_call.1} parent=35 // pred_check
          %p255 = pneg %p65
        $region38: #{tpu_custom_call.1} parent=35 // pred_check_branch
          %257 = sbr.rel (%p255) target = $region40
        $region39: #{tpu_custom_call.1} parent=35 // pred_region
          %s258 = smul.u32 8, %s16
          %p259 = scmp.lt.s32.totalorder %s258, 15
          %s260 = scalar_select %p259, %s258, 15
          %s261 = smul.addr %s260, 2
          %s262 = smul.addr %s261, 8
          %s263 = scalar_lea.vmem %s1, %s262
        $region40: #{tpu_custom_call.1} parent=35 // pred_fallthru
          _
      $region36: #{tpu_custom_call.1} parent=5 // pred_fallthru
        _
    $region6: #{tpu_custom_call.1} parent=1 // loop_footer
      %s14 = sadd.s32 1, %s10
    $region7: #{tpu_custom_call.1} parent=1 // loop_footer_branch
      %9 = sbr.rel target = $region3
    $region8: #{tpu_custom_call.1} parent=1 // loop_exit
      _
    %264 = vsyncpa [#allocation3], 1
    %s265 = scalar_lea.sflag [#allocation3], 1
    %266 = vsyncpa %s265, 1

</llo_original>
